<compile_context>
chip_gen: v6e
topology: v6e:2x2x1
jax: 0.10.0
libtpu: 0.0.40
codegen_flags: <defaults>
</compile_context>

<pallas_src>
import functools

import jax
import jax.numpy as jnp
import numpy as np
from jax import lax
from jax.experimental import pallas as pl
from jax.experimental.pallas import tpu as pltpu


# 48 MiB scoped-VMEM limit: <= v7x's 64 MiB physical VMEM, well under the
# 128 MiB of v5e/v6e (and above their 16 / 32 MiB scoped defaults).
_VMEM_LIMIT = 48 * 1024 * 1024
_VMEM_BUDGET = 40 * 1024 * 1024      # block-sizing budget (headroom vs limit)


# ----------------------------------------------------------------------------
# In-VMEM m<->c swizzles: frame-major (m*c, wh)  <->  token slab (c, m*wh).
# These replace the XLA/HBM round-trip transposes of the previous revision
# with static lane/sublane slices + concats on VMEM-resident tiles.
# ----------------------------------------------------------------------------
def _frames_to_slab(x, n_frames, c):
    """(n_frames*c, wh) -> (c, n_frames*wh)."""
    if n_frames == 1:
        return x
    return jnp.concatenate(
        [x[i * c:(i + 1) * c, :] for i in range(n_frames)], axis=-1)


def _slab_to_frames(y, n_frames, wh):
    """(c, n_frames*wh) -> (n_frames*c, wh)."""
    if n_frames == 1:
        return y
    return jnp.concatenate(
        [y[:, i * wh:(i + 1) * wh] for i in range(n_frames)], axis=0)


# ----------------------------------------------------------------------------
# Pallas kernels
# ----------------------------------------------------------------------------
def _attn_kernel(x_ref, wqkv_ref, o_ref, *, c_attn, n_frames, scale):
    """Single-head self-attention (+ residual) for one batch sample.

    x_ref/o_ref: (n_frames*c_attn, wh) frame-major block (free view of NCHW).
    wqkv_ref:    (3*c_attn, c_attn) fused, pre-transposed, pre-cast bf16 weight.
    Internally the matmuls / softmax run on a (c_attn, N) slab with
    N = n_frames*wh tokens on the lane axis (>=128 for s_extraction here).
    """
    wh = x_ref.shape[-1]
    x = _frames_to_slab(x_ref[...], n_frames, c_attn)            # (c, N) f32
    xb = x.astype(jnp.bfloat16)
    w_qkv = wqkv_ref[...]                                        # (3c, c) bf16
    # One fused MXU matmul for q, k, v with f32 accumulation.
    qkv = jnp.dot(w_qkv, xb, preferred_element_type=jnp.float32)   # (3c, N)
    # Fold 1/sqrt(c) into q: c*N multiplies instead of N^2 on the scores.
    q = (qkv[0:c_attn] * scale).astype(jnp.bfloat16)
    k = qkv[c_attn:2 * c_attn].astype(jnp.bfloat16)
    v = qkv[2 * c_attn:3 * c_attn].astype(jnp.bfloat16)
    # Scores: contract the channel axis of q and k in place (no k.T copy).
    s = lax.dot_general(q, k, (((0,), (0,)), ((), ())),
                        preferred_element_type=jnp.float32)         # (N, N)
    # f32 softmax statistics (v5e has no bf16 VPU).
    s = s - jnp.max(s, axis=-1, keepdims=True)
    p = jnp.exp(s)
    # approx reciprocal -> EUP slot; ~1e-3 rel. error accepted per review.
    inv = pl.reciprocal(jnp.sum(p, axis=-1, keepdims=True), approx=True)
    p = (p * inv).astype(jnp.bfloat16)
    # attn = V . P^T : contract the key/token axes in place (no transposes).
    attn = lax.dot_general(v, p, (((1,), (1,)), ((), ())),
                           preferred_element_type=jnp.float32)      # (c, N)
    y = x + attn                                                    # residual, f32
    # Un-swizzle back to the module's frame layout before the store.
    o_ref[...] = _slab_to_frames(y, n_frames, wh).astype(o_ref.dtype)
    # TODO(synk): for real sizes with N = n_frames*wh >~ 1-2K, switch to a
    # KV-tiled online-softmax (flash) form so the (N, N) score tile never has
    # to fit VMEM (matters first on v7x's 64 MiB VMEM).


def _merge_kernel(sem_ref, dyn_ref, mer_ref, wm_ref, bm_ref, wc_ref, bc_ref,
                  o_ref, *, c, n_frames):
    """Fused _merge: relu(W_merge.[sem;dyn] + b_m) + relu(W_conv.mer + b_c).

    Activations are (bt, m*c, wh) frame-major blocks.  All bt*m frames of the
    block are regrouped in VMEM into (c, n_frames*wh) slabs (lane width >=128),
    so the whole block needs only 2 MXU pushes: the reference's channel concat
    is a sublane concat hit with the full (c, 2c) merge weight, and the conv
    path is one (c, c) matmul.  The output is stored back in the frame layout,
    so the returned (B, m, c, w, h) stack is a free reshape (no HBM transpose).
    """
    wh = sem_ref.shape[-1]
    flat = (n_frames * c, wh)
    w_m = wm_ref[...]                            # (c, 2c) bf16 (pre-cast)
    w_c = wc_ref[...]                            # (c, c)  bf16 (pre-cast)
    b_m = bm_ref[...]                            # (c, 1)  f32
    b_c = bc_ref[...]                            # (c, 1)  f32
    sem = _frames_to_slab(sem_ref[...].reshape(flat), n_frames, c)   # (c, n*wh)
    dyn = _frames_to_slab(dyn_ref[...].reshape(flat), n_frames, c)
    mer = _frames_to_slab(mer_ref[...].reshape(flat), n_frames, c)
    cat = jnp.concatenate([sem, dyn], axis=0).astype(jnp.bfloat16)   # (2c, n*wh)
    t_m = jnp.dot(w_m, cat, preferred_element_type=jnp.float32)      # (c, n*wh)
    t_c = jnp.dot(w_c, mer.astype(jnp.bfloat16),
                  preferred_element_type=jnp.float32)                # (c, n*wh)
    val = jnp.maximum(t_m + b_m, 0.0) + jnp.maximum(t_c + b_c, 0.0)  # f32
    out = _slab_to_frames(val, n_frames, wh)                         # (n*c, wh)
    o_ref[...] = out.astype(o_ref.dtype).reshape(o_ref.shape)


# ----------------------------------------------------------------------------
# Pallas wrappers
# ----------------------------------------------------------------------------
def _pick_block_batch(n, bytes_per_item, budget_bytes=_VMEM_BUDGET, min_steps=2):
    """Largest per-grid-step batch that keeps the working set under the VMEM
    budget while leaving >= min_steps grid steps (so both v7x TensorCores get
    work and the BlockSpec pipeline can overlap DMA with compute).  On the
    single-TC v5e/v6e parts min_steps=1 would allow one bigger block."""
    best = 1
    for bt in range(1, n + 1):
        if n % bt:
            continue
        if bt * bytes_per_item <= budget_bytes and n // bt >= min_steps:
            best = bt
    return best


def mab_forward(x_frames, w_qkv_t, *, c_attn, n_frames):
    """MAB stand-in on a frame-major (B, n_frames*c_attn, wh) slab.

    One sample per grid step: each step already carries O(N^2) softmax work,
    live ranges stay bounded (a single (N, N) score tile), and the grid has
    the maximum number of parallel steps for pipelining / v7x megacore."""
    B, MC, wh = x_frames.shape
    kernel = functools.partial(_attn_kernel, c_attn=c_attn, n_frames=n_frames,
                               scale=float(1.0 / np.sqrt(c_attn)))
    return pl.pallas_call(
        kernel,
        out_shape=jax.ShapeDtypeStruct((B, MC, wh), x_frames.dtype),
        grid=(B,),
        in_specs=[
            pl.BlockSpec((None, MC, wh), lambda b: (b, 0, 0)),
            pl.BlockSpec((3 * c_attn, c_attn), lambda b: (0, 0)),
        ],
        out_specs=pl.BlockSpec((None, MC, wh), lambda b: (b, 0, 0)),
        compiler_params=pltpu.CompilerParams(
            dimension_semantics=("parallel",),
            vmem_limit_bytes=_VMEM_LIMIT),
    )(x_frames, w_qkv_t)


def merge_forward(sem, dyn, mer, w_merge, b_merge, w_conv, b_conv, *, m, c):
    """Fused BottleneckLayer(merge) + BottleneckLayer(conv) + residual add.

    sem/dyn/mer are frame-major (B, m*c, wh) slabs (free NCHW reshapes); the
    output uses the same layout so the final (B, m, c, w, h) view is free."""
    B, MC, wh = sem.shape
    # Pre-transpose / pre-cast weights once (bf16 halves their HBM/DMA bytes).
    w_m = w_merge.T.astype(jnp.bfloat16)             # (c, 2c)
    w_c = w_conv.T.astype(jnp.bfloat16)              # (c, c)
    b_m = b_merge.reshape(c, 1).astype(jnp.float32)
    b_c = b_conv.reshape(c, 1).astype(jnp.float32)
    # VMEM-aware block batching: 2x double-buffered I/O + in-kernel temporaries.
    bytes_per_sample = (2 * 4 + 10) * MC * wh * 4
    bt = _pick_block_batch(B, bytes_per_sample)
    kernel = functools.partial(_merge_kernel, c=c, n_frames=bt * m)
    return pl.pallas_call(
        kernel,
        out_shape=jax.ShapeDtypeStruct((B, MC, wh), sem.dtype),
        grid=(B // bt,),
        in_specs=[
            pl.BlockSpec((bt, MC, wh), lambda i: (i, 0, 0)),
            pl.BlockSpec((bt, MC, wh), lambda i: (i, 0, 0)),
            pl.BlockSpec((bt, MC, wh), lambda i: (i, 0, 0)),
            pl.BlockSpec((c, 2 * c), lambda i: (0, 0)),
            pl.BlockSpec((c, 1), lambda i: (0, 0)),
            pl.BlockSpec((c, c), lambda i: (0, 0)),
            pl.BlockSpec((c, 1), lambda i: (0, 0)),
        ],
        out_specs=pl.BlockSpec((bt, MC, wh), lambda i: (i, 0, 0)),
        compiler_params=pltpu.CompilerParams(
            dimension_semantics=("parallel",),
            vmem_limit_bytes=_VMEM_LIMIT),
    )(sem, dyn, mer, w_m, b_m, w_c, b_c)


# ----------------------------------------------------------------------------
# EncLayer forward (plumbing mirrors the PyTorch code)
# ----------------------------------------------------------------------------
def content_nce_l2(z1, z2):
    # TODO(synk): calculate_content_nce source unavailable; InfoNCE with -L2^2
    # similarities.  Gram-matrix identity avoids the O(B^2*F) intermediate and
    # is invariant to the (consistent) in-sample feature permutation.
    B = z1.shape[0]
    a = z1.reshape(B, -1)
    b = z2.reshape(B, -1)
    aa = jnp.sum(a * a, axis=-1, keepdims=True)               # (B, 1)
    bb = jnp.sum(b * b, axis=-1, keepdims=True)               # (B, 1)
    ab = jnp.dot(a, b.T, preferred_element_type=jnp.float32)  # (B, B)
    logits = -(aa + bb.T - 2.0 * ab)
    logp = jax.nn.log_softmax(logits, axis=-1)
    return -jnp.mean(jnp.diagonal(logp))


def init_params(key, m, c):
    ks = jax.random.split(key, 10)
    scale = 0.1

    def w(k, shape):
        return scale * jax.random.normal(k, shape, jnp.float32)

    return {
        # MAB((c, w*m, h)): attention over c-dim channel embeddings
        "s_extraction": (w(ks[0], (c, c)), w(ks[1], (c, c)), w(ks[2], (c, c))),
        # MAB((c*m, w, h)): attention over (c*m)-dim channel embeddings
        "d_extraction": (w(ks[3], (c * m, c * m)),
                         w(ks[4], (c * m, c * m)),
                         w(ks[5], (c * m, c * m))),
        # BottleneckLayer(2c, c)
        "merge": (w(ks[6], (2 * c, c)), w(ks[7], (c,))),
        # BottleneckLayer(c, c)
        "conv": (w(ks[8], (c, c)), w(ks[9], (c,))),
    }


def enc_layer_forward(params, semantics, dynamics, merged, s_aug,
                      m, c, w, h, training=True):
    # semantics/dynamics/merged/s_aug: (B, m, c, w, h) f32
    B = semantics.shape[0]
    wh = w * h
    MC = m * c

    # Frame-major (B, m*c, w*h) slabs: free reshapes of NCHW, no XLA transposes.
    sem_in = semantics.reshape(B, MC, wh)
    dyn_in = dynamics.reshape(B, MC, wh)
    mer_in = merged.reshape(B, MC, wh)

    # Fuse + pre-transpose + pre-cast the QKV weights once per call (bf16).
    wq, wk, wv = params["s_extraction"]
    wqkv_s = jnp.concatenate([wq, wk, wv], axis=1).T.astype(jnp.bfloat16)
    wq, wk, wv = params["d_extraction"]
    wqkv_d = jnp.concatenate([wq, wk, wv], axis=1).T.astype(jnp.bfloat16)

    # s_extraction == MAB((c, m*w, h)): attention over the m*w*h tokens of
    # c-dim embeddings (the torch.cat over the seq dim is the in-kernel
    # frames->slab regroup, lane width m*w*h >= 128).
    sem = mab_forward(sem_in, wqkv_s, c_attn=c, n_frames=m)

    nce = jnp.float32(0.0)
    if training:
        aug_in = s_aug.reshape(B, MC, wh)
        c_aug = lax.stop_gradient(
            mab_forward(aug_in, wqkv_s, c_attn=c, n_frames=m))
        nce = content_nce_l2(sem, c_aug)

    # d_extraction == MAB((c*m, w, h)): attention over w*h tokens of
    # (c*m)-dim embeddings (the torch.cat over channels is a free reshape).
    dyn = mab_forward(dyn_in, wqkv_d, c_attn=MC, n_frames=1)

    # _merge (conv + merge + residual) fused into one pipelined Pallas call,
    # consuming sem/dyn/merged directly in their existing HBM layouts.
    value = merge_forward(sem, dyn, mer_in, *params["merge"], *params["conv"],
                          m=m, c=c)

    # torch.stack back to (B, m, c, w, h): free reshapes (frame-major already).
    sem_stack = sem.reshape(B, m, c, w, h)
    dyn_stack = dyn.reshape(B, m, c, w, h)
    value = value.reshape(B, m, c, w, h)
    return sem_stack, dyn_stack, value, nce


# ----------------------------------------------------------------------------
if __name__ == "__main__":
    B, m, c, w, h = 2, 2, 4, 8, 8   # input_shape=(c, w, h), seq_len=m

    key = jax.random.PRNGKey(0)
    k_sem, k_dyn, k_mrg, k_aug, k_par = jax.random.split(key, 5)
    semantics = jax.random.normal(k_sem, (B, m, c, w, h), jnp.float32)
    dynamics = jax.random.normal(k_dyn, (B, m, c, w, h), jnp.float32)
    merged = jax.random.normal(k_mrg, (B, m, c, w, h), jnp.float32)
    s_aug = jax.random.normal(k_aug, (B, m, c, w, h), jnp.float32)

    params = init_params(k_par, m, c)

    sem_out, dyn_out, merged_out, nce = enc_layer_forward(
        params, semantics, dynamics, merged, s_aug, m, c, w, h, training=True)

    jax.block_until_ready((sem_out, dyn_out, merged_out, nce))
    assert sem_out.shape == (B, m, c, w, h)
    assert dyn_out.shape == (B, m, c, w, h)
    assert merged_out.shape == (B, m, c, w, h)
    assert np.isfinite(float(nce))
    print("KERNEL_OK")
</pallas_src>

<mosaic_0001>
module attributes {stable_mosaic.version = 11 : i64} {
  func.func @_attn_kernel(%arg0: i32, %arg1: memref<1x8x64xf32, #tpu.memory_space<vmem>>, %arg2: memref<12x4xbf16, #tpu.memory_space<vmem>>, %arg3: memref<1x8x64xf32, #tpu.memory_space<vmem>>) attributes {dimension_semantics = [#tpu.dimension_semantics<parallel>], iteration_bounds = array<i64: 2>, scalar_prefetch = 0 : i64, scratch_operands = 0 : i64, tpu.core_type = #tpu.core_type<tc>, window_params = [{transform_indices = @transform_0, window_bounds = array<i64: 1, 8, 64>}, {pipeline_mode = #tpu.pipeline_mode<synchronous>, transform_indices = @transform_1, window_bounds = array<i64: 12, 4>}, {transform_indices = @transform_2, window_bounds = array<i64: 1, 8, 64>}]} {
    %c0 = arith.constant 0 : index
    %c0_0 = arith.constant 0 : index
    %c0_1 = arith.constant 0 : index
    %0 = vector.load %arg1[%c0, %c0_0, %c0_1] : memref<1x8x64xf32, #tpu.memory_space<vmem>>, vector<1x8x64xf32>
    %1 = vector.shape_cast %0 : vector<1x8x64xf32> to vector<8x64xf32>
    %2 = vector.extract_strided_slice %1 {offsets = [0, 0], sizes = [4, 64], strides = [1, 1]} : vector<8x64xf32> to vector<4x64xf32>
    %3 = vector.extract_strided_slice %1 {offsets = [4, 0], sizes = [4, 64], strides = [1, 1]} : vector<8x64xf32> to vector<4x64xf32>
    %4 = tpu.concatenate %2, %3 in 1 : vector<4x64xf32>, vector<4x64xf32> -> vector<4x128xf32>
    %5 = arith.truncf %4 : vector<4x128xf32> to vector<4x128xbf16>
    %c0_2 = arith.constant 0 : index
    %c0_3 = arith.constant 0 : index
    %6 = vector.load %arg2[%c0_2, %c0_3] : memref<12x4xbf16, #tpu.memory_space<vmem>>, vector<12x4xbf16>
    %cst = arith.constant dense<0.000000e+00> : vector<12x128xf32>
    %7 = tpu.matmul %6, %5, %cst {dimension_numbers = #tpu.dot_dimension_numbers<[1], [0], [0], [1], [0, 0, 1, 1], [], []>} : vector<12x4xbf16>, vector<4x128xbf16>, vector<12x128xf32> -> vector<12x128xf32>
    %8 = vector.extract_strided_slice %7 {offsets = [0, 0], sizes = [4, 128], strides = [1, 1]} : vector<12x128xf32> to vector<4x128xf32>
    %cst_4 = arith.constant 5.000000e-01 : f32
    %9 = vector.broadcast %cst_4 : f32 to vector<4x128xf32>
    %10 = arith.mulf %8, %9 : vector<4x128xf32>
    %11 = arith.truncf %10 : vector<4x128xf32> to vector<4x128xbf16>
    %12 = vector.extract_strided_slice %7 {offsets = [4, 0], sizes = [4, 128], strides = [1, 1]} : vector<12x128xf32> to vector<4x128xf32>
    %13 = arith.truncf %12 : vector<4x128xf32> to vector<4x128xbf16>
    %14 = vector.extract_strided_slice %7 {offsets = [8, 0], sizes = [4, 128], strides = [1, 1]} : vector<12x128xf32> to vector<4x128xf32>
    %15 = arith.truncf %14 : vector<4x128xf32> to vector<4x128xbf16>
    %cst_5 = arith.constant dense<0.000000e+00> : vector<128x128xf32>
    %16 = tpu.matmul %11, %13, %cst_5 {dimension_numbers = #tpu.dot_dimension_numbers<[0], [0], [1], [1], [0, 1, 1, 1], [], []>} : vector<4x128xbf16>, vector<4x128xbf16>, vector<128x128xf32> -> vector<128x128xf32>
    %cst_6 = arith.constant dense<0xFF800000> : vector<128xf32>
    %17 = vector.multi_reduction <maximumf>, %16, %cst_6 [1] : vector<128x128xf32> to vector<128xf32>
    %18 = vector.shape_cast %17 : vector<128xf32> to vector<128x1xf32>
    %19 = vector.broadcast %18 : vector<128x1xf32> to vector<128x128xf32>
    %20 = arith.subf %16, %19 : vector<128x128xf32>
    %21 = math.exp %20 : vector<128x128xf32>
    %cst_7 = arith.constant dense<0.000000e+00> : vector<128xf32>
    %22 = vector.multi_reduction <add>, %21, %cst_7 [1] : vector<128x128xf32> to vector<128xf32>
    %23 = vector.shape_cast %22 : vector<128xf32> to vector<128x1xf32>
    %24 = tpu.reciprocal %23 {approx = true} : vector<128x1xf32> -> vector<128x1xf32>
    %25 = vector.broadcast %24 : vector<128x1xf32> to vector<128x128xf32>
    %26 = arith.mulf %21, %25 : vector<128x128xf32>
    %27 = arith.truncf %26 : vector<128x128xf32> to vector<128x128xbf16>
    %cst_8 = arith.constant dense<0.000000e+00> : vector<4x128xf32>
    %28 = tpu.matmul %15, %27, %cst_8 {dimension_numbers = #tpu.dot_dimension_numbers<[1], [1], [0], [0], [0, 0, 1, 0], [], []>} : vector<4x128xbf16>, vector<128x128xbf16>, vector<4x128xf32> -> vector<4x128xf32>
    %29 = arith.addf %4, %28 : vector<4x128xf32>
    %30 = vector.extract_strided_slice %29 {offsets = [0, 0], sizes = [4, 64], strides = [1, 1]} : vector<4x128xf32> to vector<4x64xf32>
    %31 = vector.extract_strided_slice %29 {offsets = [0, 64], sizes = [4, 64], strides = [1, 1]} : vector<4x128xf32> to vector<4x64xf32>
    %32 = tpu.concatenate %30, %31 in 0 : vector<4x64xf32>, vector<4x64xf32> -> vector<8x64xf32>
    %c0_9 = arith.constant 0 : index
    %c0_10 = arith.constant 0 : index
    %c0_11 = arith.constant 0 : index
    %33 = vector.load %arg3[%c0_9, %c0_10, %c0_11] : memref<1x8x64xf32, #tpu.memory_space<vmem>>, vector<1x8x64xf32>
    %34 = vector.shape_cast %33 : vector<1x8x64xf32> to vector<8x64xf32>
    %35 = vector.shape_cast %32 : vector<8x64xf32> to vector<1x8x64xf32>
    tpu.vector_store %arg3[%c0_9, %c0_10, %c0_11], %35 {strides = array<i32>} : memref<1x8x64xf32, #tpu.memory_space<vmem>>, vector<1x8x64xf32>,
    return
  }
  func.func @transform_0(%arg0: i32) -> (i32, i32, i32) {
    %c0_i32 = arith.constant 0 : i32
    %c0_i32_0 = arith.constant 0 : i32
    %c0_i32_1 = arith.constant 0 : i32
    return %arg0, %c0_i32, %c0_i32_0 : i32, i32, i32
  }
  func.func @transform_1(%arg0: i32) -> (i32, i32) {
    %c0_i32 = arith.constant 0 : i32
    %c0_i32_0 = arith.constant 0 : i32
    %c0_i32_1 = arith.constant 0 : i32
    return %c0_i32, %c0_i32_0 : i32, i32
  }
  func.func @transform_2(%arg0: i32) -> (i32, i32, i32) {
    %c0_i32 = arith.constant 0 : i32
    %c0_i32_0 = arith.constant 0 : i32
    %c0_i32_1 = arith.constant 0 : i32
    return %arg0, %c0_i32, %c0_i32_0 : i32, i32, i32
  }
}

</mosaic_0001>

<llo_original>
// kernel: tpu_custom_call.1
$region0: #{tpu_custom_call.1}
  #allocation0 [shape = 'u32[]', space=smem, size = 0x4, offset = 0x4, fixed_abs, tag = 'smem constant byte address 0x4 - core index']
  #allocation1 [shape = 'u32[144,128]{1,0:T(1,128)}', space=vmem, size = 0x12000, scoped, tag = 'internal scratch']
  %s0 = inlined_call_operand.hbm [shape: f32[2,8,64], index: 0, kind: input, shape index: {}]
  %s1 = inlined_call_operand.vmem [shape: bf16[12,4], index: 1, kind: input, shape index: {}]
  %s2 = inlined_call_operand.hbm [shape: f32[2,8,64], index: 2, kind: output, shape index: {}]
  %s3 = sld [smem:[#allocation0]]
  $region45: #{tpu_custom_call.1} parent=0
    _
  %s5 = ssub.s32 1, %s3
  %s6 = scalar_select 0, %s5, %s3
  $region1: #{tpu_custom_call.1} parent=0
    #allocation2 [shape = 'u8[8192]{0}', space=vmem, size = 0x2000, scoped, tag = 'input window, operand 0']
    #allocation3 [shape = 's32[2]{0}', space=sflag, size = 0x8, scoped, tag = 'scoped memory for tpu_custom_call.1']
    #allocation4 [shape = 's32[2]{0}', space=sflag, size = 0x8, scoped, tag = 'scoped memory for tpu_custom_call.1']
    #allocation5 [shape = 'u8[8192]{0}', space=vmem, size = 0x2000, scoped, tag = 'output window, operand 0']
    %7 = vsyncpa [#allocation3], 0
    %s8 = scalar_lea.sflag [#allocation3], 1
    %9 = vsyncpa %s8, 0
    %10 = vsyncpa [#allocation4], 0
    %s11 = scalar_lea.sflag [#allocation4], 1
    %12 = vsyncpa %s11, 0
    loop: start=0, step=1, limit=4
    $region2: #{tpu_custom_call.1} parent=1 // loop_pre_header
      _
    $region3: #{tpu_custom_call.1} parent=1 // loop_header
      %s14 = sphi 0, %s18
      %p15 = scmp.ge.s32.totalorder %s14, 4
      %s24 = sphi 0, %s26
      %s27 = sphi 0, %s24
      %s28 = sphi 0, %s27
      %s44 = sphi 0, %s28
      %s48 = sphi 0, %s48
      %s50 = sphi 0, %s48
      %s51 = sphi 0, %s50
      %s65 = sphi 0, %s51
      %s71 = sphi 0, %s73
      %s74 = sphi 0, %s71
      %s75 = sphi 0, %s74
      %s91 = sphi 0, %s75
    $region4: #{tpu_custom_call.1} parent=1 // loop_header_branch
      %17 = sbr.rel (%p15) target = $region8
    $region5: #{tpu_custom_call.1} parent=1 // loop_body
      %s19 = ssub.s32 %s14, 1
      %s20 = ssub.s32 %s14, 2
      %s21 = sadd.s32 %s14, 1
      %s22 = ssub.s32 %s14, %s21
      %p23 = scmp.eq.s32.totalorder %s22, 0
      %s25 = sadd.s32 %s24, 1
      %s26 = scalar_select %p23, %s24, %s25
      %p29 = pneg %p23
      %p30 = scmp.eq.s32.totalorder %s14, 1
      %p31 = por %p29, %p30
      %p32 = scmp.ne.s32.totalorder %s24, %s27
      %p33 = scmp.eq.s32.totalorder %s14, 0
      %p34 = por %p32, %p33
      %p35 = scmp.ne.s32.totalorder %s24, %s27
      %p36 = scmp.eq.s32.totalorder %s19, 1
      %p37 = por %p35, %p36
      %p38 = scmp.ne.s32.totalorder %s27, %s28
      %p39 = scmp.eq.s32.totalorder %s19, 0
      %p40 = por %p38, %p39
      %p41 = scmp.ne.s32.totalorder %s27, %s28
      %p42 = scmp.eq.s32.totalorder %s20, 1
      %p43 = por %p41, %p42
      %p45 = scmp.ne.s32.totalorder %s28, %s44
      %p46 = scmp.eq.s32.totalorder %s20, 0
      %p47 = por %p45, %p46
      %s49 = sadd.s32 %s48, 1
      %p52 = scmp.eq.s32.totalorder %s14, 1
      %p53 = scmp.ne.s32.totalorder %s48, %s50
      %p54 = scmp.eq.s32.totalorder %s14, 0
      %p55 = por %p53, %p54
      %p56 = scmp.ne.s32.totalorder %s48, %s50
      %p57 = scmp.eq.s32.totalorder %s19, 1
      %p58 = por %p56, %p57
      %p59 = scmp.ne.s32.totalorder %s50, %s51
      %p60 = scmp.eq.s32.totalorder %s19, 0
      %p61 = por %p59, %p60
      %p62 = scmp.ne.s32.totalorder %s50, %s51
      %p63 = scmp.eq.s32.totalorder %s20, 1
      %p64 = por %p62, %p63
      %p66 = scmp.ne.s32.totalorder %s51, %s65
      %p67 = scmp.eq.s32.totalorder %s20, 0
      %p68 = por %p66, %p67
      %s69 = ssub.s32 %s14, %s21
      %p70 = scmp.eq.s32.totalorder %s69, 0
      %s72 = sadd.s32 %s71, 1
      %s73 = scalar_select %p70, %s71, %s72
      %p76 = pneg %p70
      %p77 = scmp.eq.s32.totalorder %s14, 1
      %p78 = por %p76, %p77
      %p79 = scmp.ne.s32.totalorder %s71, %s74
      %p80 = scmp.eq.s32.totalorder %s14, 0
      %p81 = por %p79, %p80
      %p82 = scmp.ne.s32.totalorder %s71, %s74
      %p83 = scmp.eq.s32.totalorder %s19, 1
      %p84 = por %p82, %p83
      %p85 = scmp.ne.s32.totalorder %s74, %s75
      %p86 = scmp.eq.s32.totalorder %s19, 0
      %p87 = por %p85, %p86
      %p88 = scmp.ne.s32.totalorder %s74, %s75
      %p89 = scmp.eq.s32.totalorder %s20, 1
      %p90 = por %p88, %p89
      %p92 = scmp.ne.s32.totalorder %s75, %s91
      %p93 = scmp.eq.s32.totalorder %s20, 0
      %p94 = por %p92, %p93
      %p95 = scmp.le.s32.totalorder 1, %s14
      %p96 = scmp.lt.s32.totalorder %s14, 3
      %p97 = pnand %p95, %p96
      %p98 = pneg %p97
      // Predicated region
      $region9: #{tpu_custom_call.1} parent=5 // pred_check
        _
      $region10: #{tpu_custom_call.1} parent=5 // pred_check_branch
        %100 = sbr.rel (%p97) target = $region12
      $region11: #{tpu_custom_call.1} parent=5 // pred_region
        %s101 = ssub.s32 %s14, 1
        // Predicated region
        $region13: #{tpu_custom_call.1} parent=11 // pred_check
          %p102 = pneg %p61
        $region14: #{tpu_custom_call.1} parent=11 // pred_check_branch
          %104 = sbr.rel (%p102) target = $region16
        $region15: #{tpu_custom_call.1} parent=11 // pred_region
          _
        $region16: #{tpu_custom_call.1} parent=11 // pred_fallthru
          _
      $region12: #{tpu_custom_call.1} parent=5 // pred_fallthru
        _
      %p105 = scmp.lt.s32.totalorder %s14, 2
      // Predicated region
      $region17: #{tpu_custom_call.1} parent=5 // pred_check
        %p106 = pneg %p105
      $region18: #{tpu_custom_call.1} parent=5 // pred_check_branch
        %108 = sbr.rel (%p106) target = $region20
      $region19: #{tpu_custom_call.1} parent=5 // pred_region
        // Predicated region
        $region21: #{tpu_custom_call.1} parent=19 // pred_check
          %p109 = pneg %p34
        $region22: #{tpu_custom_call.1} parent=19 // pred_check_branch
          %111 = sbr.rel (%p109) target = $region24
        $region23: #{tpu_custom_call.1} parent=19 // pred_region
          %s112 = sand.u32 %s24, 1
          %s113 = scalar_lea.sflag [#allocation3], %s112
          %s114 = sand.u32 %s24, 1
          %s115 = smul.addr %s114, 8
          %s116 = scalar_lea.vmem [#allocation2], %s115
          %s118 = ssub.s32 128, 128
          %119 = vsyncadd %s113, %s118
          %s120 = smul.addr %s14, 128
          %s121 = scalar_lea.hbm %s0, %s120
          %s123 = sshll.u32 %s116, 4
          %s124 = int_to_ptr.vmem [resolvable:$true] %s123
          %126 = dma.hbm_to_vmem [thread:$0]  %s121, 128, %s124, %s113
        $region24: #{tpu_custom_call.1} parent=19 // pred_fallthru
          _
      $region20: #{tpu_custom_call.1} parent=5 // pred_fallthru
        _
      %p127 = scmp.le.s32.totalorder 1, %s14
      %p128 = scmp.lt.s32.totalorder %s14, 3
      %p129 = pnand %p127, %p128
      %p130 = pneg %p129
      // Predicated region
      $region25: #{tpu_custom_call.1} parent=5 // pred_check
        _
      $region26: #{tpu_custom_call.1} parent=5 // pred_check_branch
        %132 = sbr.rel (%p129) target = $region28
      $region27: #{tpu_custom_call.1} parent=5 // pred_region
        %s133 = ssub.s32 %s14, 1
        %s134 = sand.u32 %s27, 1
        %s135 = scalar_lea.sflag [#allocation3], %s134
        %s136 = sand.u32 %s27, 1
        %s137 = smul.addr %s136, 8
        %s138 = scalar_lea.vmem [#allocation2], %s137
        // Predicated region
        $region29: #{tpu_custom_call.1} parent=27 // pred_check
          %p139 = pneg %p40
        $region30: #{tpu_custom_call.1} parent=27 // pred_check_branch
          %141 = sbr.rel (%p139) target = $region32
        $region31: #{tpu_custom_call.1} parent=27 // pred_region
          %142 = dma.done %s135, 128
        $region32: #{tpu_custom_call.1} parent=27 // pred_fallthru
          _
        %s143 = sand.u32 %s27, 1
        %s144 = scalar_lea.sflag [#allocation3], %s143
        %s145 = sand.u32 %s27, 1
        %s146 = smul.addr %s145, 8
        %s147 = scalar_lea.vmem [#allocation2], %s146
        %p148 = pneg %p40
        %p149 = pneg %p37
        %p150 = pneg %p61
        %p151 = pneg %p58
        %p152 = pneg %p87
        %p153 = pneg %p84
        %s154 = sand.u32 %s74, 1
        %s155 = scalar_lea.sflag [#allocation4], %s154
        %s156 = sand.u32 %s74, 1
        %s157 = smul.addr %s156, 8
        %s158 = scalar_lea.vmem [#allocation5], %s157
        %v160 = vld [vmem:[%s138] sm:$0xff]
        %v162 = vrot.slane %v160, 4
        %163 = vrot.lane.b32.xlu0 %v162, 64
        %v164 = vpop.permute.xlu0 %163
        %vm166 = vcmask 523264
        %v167 = vsel %vm166, %v160, %v164
        %v168 = vpack.c.bf16 %v167, %v167
        %v169 = vld [vmem:[%s1] sm:$0xf]
        %v170 = vld [vmem:[%s1 + $0x4] sm:$0x3]
        %v173 = vunpack.c.l.b16 %v169
        %v174 = vunpack.c.l.b16 %v170
        %v175 = vpack.c.b16 %v174, %v173
        %vm176 = vcmask 31744
        %v178 = vsel %vm176, %v175, 0
        %vm180 = vcmask 1041408
        %v182 = vsel %vm180, %v168, 0
        %184 = vmatprep.subr.bf16.mxu0 0
        %185 = vmatpush1.bf16.msra.mxu0 0
        %186 = vmatprep.subr.bf16.mxu0 0
        %187 = vmatpush1.bf16.msra.mxu0 0
        %188 = vmatprep.subr.bf16.mxu0 0
        %189 = vmatpush1.bf16.msra.mxu0 0
        %190 = vmatprep.subr.bf16.mxu0 0
        %191 = vmatpush1.bf16.msra.mxu0 0
        %192 = vmatprep.subr.bf16.mxu0 0
        %193 = vmatpush1.bf16.msra.mxu0 0
        %194 = vmatprep.subr.bf16.mxu0 0
        %195 = vmatpush1.bf16.msra.mxu0 0
        %196 = vmatprep.subr.bf16.mxu0 0
        %197 = vmatpush1.bf16.msra.mxu0 0
        %198 = vmatprep.subr.bf16.mxu0 0
        %199 = vmatpush1.bf16.msra.mxu0 %v182
        %200 = vmatprep.subr.bf16.mxu0 0
        %201 = vmatpush2.bf16.msra.mxu0 0
        %202 = vmatprep.subr.bf16.mxu0 0
        %203 = vmatpush2.bf16.msra.mxu0 0
        %204 = vmatprep.subr.bf16.mxu0 0
        %205 = vmatpush2.bf16.msra.mxu0 0
        %206 = vmatprep.subr.bf16.mxu0 0
        %207 = vmatpush2.bf16.msra.mxu0 0
        %208 = vmatprep.subr.bf16.mxu0 0
        %209 = vmatpush2.bf16.msra.mxu0 0
        %210 = vmatprep.subr.bf16.mxu0 0
        %211 = vmatpush2.bf16.msra.mxu0 0
        %212 = vmatprep.subr.bf16.mxu0 0
        %213 = vmatpush2.bf16.msra.mxu0 0
        %214 = vmatprep.subr.bf16.mxu0 0
        %215 = vmatpush2.bf16.msra.mxu0 0
        %216 = vmatprep.mubr.bf16.mxu0 0
        %217 = vmatmul.mubr.bf16.gmra.mxu0 %v178
        %v218 = vpop.f32.mrf.mxu0
        %v219 = vadd.f32 0.0, %v218
        %v220 = vpop.f32.mrf.mxu0
        %v221 = vpop.f32.mrf.mxu0
        %v222 = vadd.f32 0.0, %v221
        %v223 = vpop.f32.mrf.mxu0
        %224 = vdwg.mxu0
        %v225 = vmul.f32 %v219, 0.5
        %v226 = vpack.c.bf16 %v225, %v225
        %v227 = vpack.c.bf16 %v219, %v219
        %v228 = vpack.c.bf16 %v222, %v222
        %229 = vxpose.xlu0.c.b16.start [1/8] %v226, 128
        %230 = vxpose.xlu0.c.b16.cont [2/8] 0, 128
        %231 = vxpose.xlu0.c.b16.cont [3/8] 0, 128
        %232 = vxpose.xlu0.c.b16.cont [4/8] 0, 128
        %233 = vxpose.xlu0.c.b16.cont [5/8] 0, 128
        %234 = vxpose.xlu0.c.b16.cont [6/8] 0, 128
        %235 = vxpose.xlu0.c.b16.cont [7/8] 0, 128
        %236 = vxpose.xlu0.c.b16.end [8/8] 0, 128
        %v237 = vpop.trf.xlu0
        %v238 = vpop.trf.xlu0
        %v239 = vpop.trf.xlu0
        %v240 = vpop.trf.xlu0
        %v241 = vpop.trf.xlu0
        %v242 = vpop.trf.xlu0
        %v243 = vpop.trf.xlu0
        %v244 = vpop.trf.xlu0
        %v246 = vrot.slane %v227, 2
        %v248 = vsel %vm176, %v237, 0
        %v251 = vsel %vm176, %v238, 0
        %v254 = vsel %vm176, %v239, 0
        %v257 = vsel %vm176, %v240, 0
        %v260 = vsel %vm176, %v241, 0
        %v263 = vsel %vm176, %v242, 0
        %v266 = vsel %vm176, %v243, 0
        %v269 = vsel %vm176, %v244, 0
        %v272 = vsel %vm180, %v246, 0
        %274 = vmatprep.subr.bf16.mxu0 0
        %275 = vmatpush1.bf16.msra.mxu0 0
        %276 = vmatprep.subr.bf16.mxu0 0
        %277 = vmatpush1.bf16.msra.mxu0 0
        %278 = vmatprep.subr.bf16.mxu0 0
        %279 = vmatpush1.bf16.msra.mxu0 0
        %280 = vmatprep.subr.bf16.mxu0 0
        %281 = vmatpush1.bf16.msra.mxu0 0
        %282 = vmatprep.subr.bf16.mxu0 0
        %283 = vmatpush1.bf16.msra.mxu0 0
        %284 = vmatprep.subr.bf16.mxu0 0
        %285 = vmatpush1.bf16.msra.mxu0 0
        %286 = vmatprep.subr.bf16.mxu0 0
        %287 = vmatpush1.bf16.msra.mxu0 0
        %288 = vmatprep.subr.bf16.mxu0 0
        %289 = vmatpush1.bf16.msra.mxu0 %v272
        %290 = vmatprep.subr.bf16.mxu0 0
        %291 = vmatpush2.bf16.msra.mxu0 0
        %292 = vmatprep.subr.bf16.mxu0 0
        %293 = vmatpush2.bf16.msra.mxu0 0
        %294 = vmatprep.subr.bf16.mxu0 0
        %295 = vmatpush2.bf16.msra.mxu0 0
        %296 = vmatprep.subr.bf16.mxu0 0
        %297 = vmatpush2.bf16.msra.mxu0 0
        %298 = vmatprep.subr.bf16.mxu0 0
        %299 = vmatpush2.bf16.msra.mxu0 0
        %300 = vmatprep.subr.bf16.mxu0 0
        %301 = vmatpush2.bf16.msra.mxu0 0
        %302 = vmatprep.subr.bf16.mxu0 0
        %303 = vmatpush2.bf16.msra.mxu0 0
        %304 = vmatprep.subr.bf16.mxu0 0
        %305 = vmatpush2.bf16.msra.mxu0 0
        %306 = vmatprep.mubr.bf16.mxu0 0
        %307 = vmatmul.mubr.bf16.gmra.mxu0 %v248
        %v308 = vpop.f32.mrf.mxu0
        %v309 = vadd.f32 0.0, %v308
        %v310 = vpop.f32.mrf.mxu0
        %v311 = vpop.f32.mrf.mxu0
        %v312 = vadd.f32 0.0, %v311
        %v313 = vpop.f32.mrf.mxu0
        %314 = vmatprep.mubr.bf16.mxu0 0
        %315 = vmatmul.mubr.bf16.gmra.mxu0 %v251
        %v316 = vpop.f32.mrf.mxu0
        %v317 = vadd.f32 0.0, %v316
        %v318 = vpop.f32.mrf.mxu0
        %v319 = vpop.f32.mrf.mxu0
        %v320 = vadd.f32 0.0, %v319
        %v321 = vpop.f32.mrf.mxu0
        %322 = vmatprep.mubr.bf16.mxu0 0
        %323 = vmatmul.mubr.bf16.gmra.mxu0 %v254
        %v324 = vpop.f32.mrf.mxu0
        %v325 = vadd.f32 0.0, %v324
        %v326 = vpop.f32.mrf.mxu0
        %v327 = vpop.f32.mrf.mxu0
        %v328 = vadd.f32 0.0, %v327
        %v329 = vpop.f32.mrf.mxu0
        %330 = vmatprep.mubr.bf16.mxu0 0
        %331 = vmatmul.mubr.bf16.gmra.mxu0 %v257
        %v332 = vpop.f32.mrf.mxu0
        %v333 = vadd.f32 0.0, %v332
        %v334 = vpop.f32.mrf.mxu0
        %v335 = vpop.f32.mrf.mxu0
        %v336 = vadd.f32 0.0, %v335
        %v337 = vpop.f32.mrf.mxu0
        %338 = vmatprep.mubr.bf16.mxu0 0
        %339 = vmatmul.mubr.bf16.gmra.mxu0 %v260
        %v340 = vpop.f32.mrf.mxu0
        %v341 = vadd.f32 0.0, %v340
        %v342 = vpop.f32.mrf.mxu0
        %v343 = vpop.f32.mrf.mxu0
        %v344 = vadd.f32 0.0, %v343
        %v345 = vpop.f32.mrf.mxu0
        %346 = vmatprep.mubr.bf16.mxu0 0
        %347 = vmatmul.mubr.bf16.gmra.mxu0 %v263
        %v348 = vpop.f32.mrf.mxu0
        %v349 = vadd.f32 0.0, %v348
        %v350 = vpop.f32.mrf.mxu0
        %v351 = vpop.f32.mrf.mxu0
        %v352 = vadd.f32 0.0, %v351
        %v353 = vpop.f32.mrf.mxu0
        %354 = vmatprep.mubr.bf16.mxu0 0
        %355 = vmatmul.mubr.bf16.gmra.mxu0 %v266
        %v356 = vpop.f32.mrf.mxu0
        %v357 = vadd.f32 0.0, %v356
        %v358 = vpop.f32.mrf.mxu0
        %v359 = vpop.f32.mrf.mxu0
        %v360 = vadd.f32 0.0, %v359
        %v361 = vpop.f32.mrf.mxu0
        %362 = vmatprep.mubr.bf16.mxu0 0
        %363 = vmatmul.mubr.bf16.gmra.mxu0 %v269
        %v364 = vpop.f32.mrf.mxu0
        %v365 = vadd.f32 0.0, %v364
        %v366 = vpop.f32.mrf.mxu0
        %v367 = vpop.f32.mrf.mxu0
        %v368 = vadd.f32 0.0, %v367
        %v369 = vpop.f32.mrf.mxu0
        %370 = vdwg.mxu0
        %371 = vmax.xlane.f32.xlu0 %v309
        %v372 = vpop.xlane.xlu0 %371
        %373 = vmax.xlane.f32.xlu0 %v312
        %v374 = vpop.xlane.xlu0 %373
        %375 = vmax.xlane.f32.xlu0 %v317
        %v376 = vpop.xlane.xlu0 %375
        %377 = vmax.xlane.f32.xlu0 %v320
        %v378 = vpop.xlane.xlu0 %377
        %379 = vmax.xlane.f32.xlu0 %v325
        %v380 = vpop.xlane.xlu0 %379
        %381 = vmax.xlane.f32.xlu0 %v328
        %v382 = vpop.xlane.xlu0 %381
        %383 = vmax.xlane.f32.xlu0 %v333
        %v384 = vpop.xlane.xlu0 %383
        %385 = vmax.xlane.f32.xlu0 %v336
        %v386 = vpop.xlane.xlu0 %385
        %387 = vmax.xlane.f32.xlu0 %v341
        %v388 = vpop.xlane.xlu0 %387
        %389 = vmax.xlane.f32.xlu0 %v344
        %v390 = vpop.xlane.xlu0 %389
        %391 = vmax.xlane.f32.xlu0 %v349
        %v392 = vpop.xlane.xlu0 %391
        %393 = vmax.xlane.f32.xlu0 %v352
        %v394 = vpop.xlane.xlu0 %393
        %395 = vmax.xlane.f32.xlu0 %v357
        %v396 = vpop.xlane.xlu0 %395
        %397 = vmax.xlane.f32.xlu0 %v360
        %v398 = vpop.xlane.xlu0 %397
        %399 = vmax.xlane.f32.xlu0 %v365
        %v400 = vpop.xlane.xlu0 %399
        %401 = vmax.xlane.f32.xlu0 %v368
        %v402 = vpop.xlane.xlu0 %401
        %v403 = vsub.f32 %v309, %v372
        %v404 = vsub.f32 %v312, %v374
        %v405 = vsub.f32 %v317, %v376
        %v406 = vsub.f32 %v320, %v378
        %v407 = vsub.f32 %v325, %v380
        %v408 = vsub.f32 %v328, %v382
        %v409 = vsub.f32 %v333, %v384
        %v410 = vsub.f32 %v336, %v386
        %v411 = vsub.f32 %v341, %v388
        %v412 = vsub.f32 %v344, %v390
        %v413 = vsub.f32 %v349, %v392
        %v414 = vsub.f32 %v352, %v394
        %v415 = vsub.f32 %v357, %v396
        %v416 = vsub.f32 %v360, %v398
        %v417 = vsub.f32 %v365, %v400
        %v418 = vsub.f32 %v368, %v402
        %v419 = vmul.f32 %v403, 1.442695
        %v420 = vpow.pop %v419
        %v421 = vmul.f32 %v404, 1.442695
        %v422 = vpow.pop %v421
        %v423 = vmul.f32 %v405, 1.442695
        %v424 = vpow.pop %v423
        %v425 = vmul.f32 %v406, 1.442695
        %v426 = vpow.pop %v425
        %v427 = vmul.f32 %v407, 1.442695
        %v428 = vpow.pop %v427
        %v429 = vmul.f32 %v408, 1.442695
        %v430 = vpow.pop %v429
        %v431 = vmul.f32 %v409, 1.442695
        %v432 = vpow.pop %v431
        %v433 = vmul.f32 %v410, 1.442695
        %v434 = vpow.pop %v433
        %v435 = vmul.f32 %v411, 1.442695
        %v436 = vpow.pop %v435
        %v437 = vmul.f32 %v412, 1.442695
        %v438 = vpow.pop %v437
        %v439 = vmul.f32 %v413, 1.442695
        %v440 = vpow.pop %v439
        %v441 = vmul.f32 %v414, 1.442695
        %v442 = vpow.pop %v441
        %v443 = vmul.f32 %v415, 1.442695
        %v444 = vpow.pop %v443
        %v445 = vmul.f32 %v416, 1.442695
        %v446 = vpow.pop %v445
        %v447 = vmul.f32 %v417, 1.442695
        %v448 = vpow.pop %v447
        %v449 = vmul.f32 %v418, 1.442695
        %v450 = vpow.pop %v449
        %451 = vadd.xlane.f32.xlu0 %v420
        %v452 = vpop.xlane.xlu0 %451
        %453 = vadd.xlane.f32.xlu0 %v422
        %v454 = vpop.xlane.xlu0 %453
        %455 = vadd.xlane.f32.xlu0 %v424
        %v456 = vpop.xlane.xlu0 %455
        %457 = vadd.xlane.f32.xlu0 %v426
        %v458 = vpop.xlane.xlu0 %457
        %459 = vadd.xlane.f32.xlu0 %v428
        %v460 = vpop.xlane.xlu0 %459
        %461 = vadd.xlane.f32.xlu0 %v430
        %v462 = vpop.xlane.xlu0 %461
        %463 = vadd.xlane.f32.xlu0 %v432
        %v464 = vpop.xlane.xlu0 %463
        %465 = vadd.xlane.f32.xlu0 %v434
        %v466 = vpop.xlane.xlu0 %465
        %467 = vadd.xlane.f32.xlu0 %v436
        %v468 = vpop.xlane.xlu0 %467
        %469 = vadd.xlane.f32.xlu0 %v438
        %v470 = vpop.xlane.xlu0 %469
        %471 = vadd.xlane.f32.xlu0 %v440
        %v472 = vpop.xlane.xlu0 %471
        %473 = vadd.xlane.f32.xlu0 %v442
        %v474 = vpop.xlane.xlu0 %473
        %475 = vadd.xlane.f32.xlu0 %v444
        %v476 = vpop.xlane.xlu0 %475
        %477 = vadd.xlane.f32.xlu0 %v446
        %v478 = vpop.xlane.xlu0 %477
        %479 = vadd.xlane.f32.xlu0 %v448
        %v480 = vpop.xlane.xlu0 %479
        %481 = vadd.xlane.f32.xlu0 %v450
        %v482 = vpop.xlane.xlu0 %481
        %v483 = vrcp.pop %v452
        %v484 = vrcp.pop %v454
        %v485 = vrcp.pop %v456
        %v486 = vrcp.pop %v458
        %v487 = vrcp.pop %v460
        %v488 = vrcp.pop %v462
        %v489 = vrcp.pop %v464
        %v490 = vrcp.pop %v466
        %v491 = vrcp.pop %v468
        %v492 = vrcp.pop %v470
        %v493 = vrcp.pop %v472
        %v494 = vrcp.pop %v474
        %v495 = vrcp.pop %v476
        %v496 = vrcp.pop %v478
        %v497 = vrcp.pop %v480
        %v498 = vrcp.pop %v482
        %v499 = vmul.f32 %v420, %v483
        %v500 = vmul.f32 %v422, %v484
        %v501 = vmul.f32 %v424, %v485
        %v502 = vmul.f32 %v426, %v486
        %v503 = vmul.f32 %v428, %v487
        %v504 = vmul.f32 %v430, %v488
        %v505 = vmul.f32 %v432, %v489
        %v506 = vmul.f32 %v434, %v490
        %v507 = vmul.f32 %v436, %v491
        %v508 = vmul.f32 %v438, %v492
        %v509 = vmul.f32 %v440, %v493
        %v510 = vmul.f32 %v442, %v494
        %v511 = vmul.f32 %v444, %v495
        %v512 = vmul.f32 %v446, %v496
        %v513 = vmul.f32 %v448, %v497
        %v514 = vmul.f32 %v450, %v498
        %v515 = vpack.c.bf16 %v500, %v499
        %v516 = vpack.c.bf16 %v502, %v501
        %v517 = vpack.c.bf16 %v504, %v503
        %v518 = vpack.c.bf16 %v506, %v505
        %v519 = vpack.c.bf16 %v508, %v507
        %v520 = vpack.c.bf16 %v510, %v509
        %v521 = vpack.c.bf16 %v512, %v511
        %v522 = vpack.c.bf16 %v514, %v513
        %523 = vmatprep.subr.bf16.mxu0 0
        %524 = vmatpush1.bf16.xpose.msra.mxu0 %v522
        %525 = vmatprep.subr.bf16.mxu0 0
        %526 = vmatpush1.bf16.xpose.msra.mxu0 %v521
        %527 = vmatprep.subr.bf16.mxu0 0
        %528 = vmatpush1.bf16.xpose.msra.mxu0 %v520
        %529 = vmatprep.subr.bf16.mxu0 0
        %530 = vmatpush1.bf16.xpose.msra.mxu0 %v519
        %531 = vmatprep.subr.bf16.mxu0 0
        %532 = vmatpush1.bf16.xpose.msra.mxu0 %v518
        %533 = vmatprep.subr.bf16.mxu0 0
        %534 = vmatpush1.bf16.xpose.msra.mxu0 %v517
        %535 = vmatprep.subr.bf16.mxu0 0
        %536 = vmatpush1.bf16.xpose.msra.mxu0 %v516
        %537 = vmatprep.subr.bf16.mxu0 0
        %538 = vmatpush1.bf16.xpose.msra.mxu0 %v515
        %539 = vmatprep.subr.bf16.mxu0 0
        %540 = vmatpush2.bf16.xpose.msra.mxu0 0
        %541 = vmatprep.subr.bf16.mxu0 0
        %542 = vmatpush2.bf16.xpose.msra.mxu0 0
        %543 = vmatprep.subr.bf16.mxu0 0
        %544 = vmatpush2.bf16.xpose.msra.mxu0 0
        %545 = vmatprep.subr.bf16.mxu0 0
        %546 = vmatpush2.bf16.xpose.msra.mxu0 0
        %547 = vmatprep.subr.bf16.mxu0 0
        %548 = vmatpush2.bf16.xpose.msra.mxu0 0
        %549 = vmatprep.subr.bf16.mxu0 0
        %550 = vmatpush2.bf16.xpose.msra.mxu0 0
        %551 = vmatprep.subr.bf16.mxu0 0
        %552 = vmatpush2.bf16.xpose.msra.mxu0 0
        %553 = vmatprep.subr.bf16.mxu0 0
        %554 = vmatpush2.bf16.xpose.msra.mxu0 0
        %555 = vmatprep.mubr.bf16.mxu0 0
        %556 = vmatmul.mubr.bf16.gmra.mxu0 %v228
        %v557 = vpop.f32.mrf.mxu0
        %v558 = vadd.f32 0.0, %v557
        %v559 = vpop.f32.mrf.mxu0
        %v560 = vpop.f32.mrf.mxu0
        %v561 = vpop.f32.mrf.mxu0
        %562 = vdwg.mxu0
        %v563 = vadd.f32 %v167, %v558
        %v565 = vrot.slane %v563, 4
        %566 = vrot.lane.b32.xlu0 %v565, 64
        %v567 = vpop.permute.xlu0 %566
        %vm569 = vcmask 1043456
        %v570 = vsel %vm569, %v563, %v567
        %571 = vst.msk [vmem:[%s158] sm:$0xff] %vm166, %v570
        %s572 = sand.u32 %s74, 1
        %s573 = scalar_lea.sflag [#allocation4], %s572
        %s574 = sand.u32 %s74, 1
        %s575 = smul.addr %s574, 8
        %s576 = scalar_lea.vmem [#allocation5], %s575
        // Predicated region
        $region33: #{tpu_custom_call.1} parent=27 // pred_check
          %p577 = pneg %p84
        $region34: #{tpu_custom_call.1} parent=27 // pred_check_branch
          %579 = sbr.rel (%p577) target = $region36
        $region35: #{tpu_custom_call.1} parent=27 // pred_region
          %s581 = ssub.s32 128, 128
          %582 = vsyncadd %s573, %s581
          %s583 = smul.addr %s19, 128
          %s584 = scalar_lea.hbm %s2, %s583
          %s586 = sshll.u32 %s576, 4
          %s587 = int_to_ptr.vmem [resolvable:$true] %s586
          %589 = dma.vmem_to_hbm [thread:$0]  %s587, 128, %s584, %s573
        $region36: #{tpu_custom_call.1} parent=27 // pred_fallthru
          _
      $region28: #{tpu_custom_call.1} parent=5 // pred_fallthru
        _
      %p590 = scmp.le.s32.totalorder 2, %s14
      // Predicated region
      $region37: #{tpu_custom_call.1} parent=5 // pred_check
        %p591 = pneg %p590
      $region38: #{tpu_custom_call.1} parent=5 // pred_check_branch
        %593 = sbr.rel (%p591) target = $region40
      $region39: #{tpu_custom_call.1} parent=5 // pred_region
        %s594 = ssub.s32 %s14, 2
        // Predicated region
        $region41: #{tpu_custom_call.1} parent=39 // pred_check
          %p595 = pneg %p90
        $region42: #{tpu_custom_call.1} parent=39 // pred_check_branch
          %597 = sbr.rel (%p595) target = $region44
        $region43: #{tpu_custom_call.1} parent=39 // pred_region
          %s598 = sand.u32 %s75, 1
          %s599 = scalar_lea.sflag [#allocation4], %s598
          %s600 = sand.u32 %s75, 1
          %s601 = smul.addr %s600, 8
          %s602 = scalar_lea.vmem [#allocation5], %s601
          %603 = dma.done %s599, 128
        $region44: #{tpu_custom_call.1} parent=39 // pred_fallthru
          _
      $region40: #{tpu_custom_call.1} parent=5 // pred_fallthru
        _
    $region6: #{tpu_custom_call.1} parent=1 // loop_footer
      %s18 = sadd.s32 1, %s14
    $region7: #{tpu_custom_call.1} parent=1 // loop_footer_branch
      %13 = sbr.rel target = $region3
    $region8: #{tpu_custom_call.1} parent=1 // loop_exit
      _
    %604 = vsyncpa [#allocation3], 1
    %s605 = scalar_lea.sflag [#allocation3], 1
    %606 = vsyncpa %s605, 1
    %607 = vsyncpa [#allocation4], 1
    %s608 = scalar_lea.sflag [#allocation4], 1
    %609 = vsyncpa %s608, 1

</llo_original>
